<compile_context>
chip_gen: v6e
topology: v6e:2x2x1
jax: 0.10.0
libtpu: 0.0.40
codegen_flags: <defaults>
</compile_context>

<pallas_src>
import functools

import jax
import jax.numpy as jnp
import numpy as np
from jax.experimental import pallas as pl
from jax.experimental.pallas import tpu as pltpu


_VPU_MAX_DIM = 8          # <= 3-qubit gates -> broadcast-FMA VPU path; larger -> MXU.
_MAX_COL_TILE = 8 * 1024  # columns per grid step (power of two, multiple of 128)


def _pick_col_tile(total):
    """Largest lane-dense power-of-two divisor of `total` <= _MAX_COL_TILE.

    Falls back to a single slab (`total`) when no multiple-of-128 divisor
    exists (only possible for tiny states or odd batch sizes with R < 128).
    """
    if total <= _MAX_COL_TILE:
        return total
    ct = _MAX_COL_TILE
    while ct >= 128:
        if total % ct == 0:
            return ct
        ct //= 2
    return total


def _compiler_params(block_bytes):
    # in + out blocks, double-buffered, plus the resident U tile and slack.
    vmem_limit = int(min(64 * 1024 * 1024, max(32 * 1024 * 1024, 6 * block_bytes)))
    return pltpu.CompilerParams(
        dimension_semantics=("parallel",),
        vmem_limit_bytes=vmem_limit,
        # [U, psi]: let XLA fuse the lane-gather transpose into psi's input DMA.
        allow_input_fusion=[False, True],
    )


def _gate_kernel(u_ref, psi_ref, out_ref, *, dim, normalize, use_mxu):
    # u_ref:   (dim, dim) f32 VMEM tile, constant index_map -> fetched once.
    # psi_ref: (dim, COLS) state tile in its HBM dtype.
    # out_ref: (dim, COLS).
    psi = psi_ref[...].astype(jnp.float32)
    u = u_ref[...]
    if use_mxu:
        acc = jnp.dot(u, psi, preferred_element_type=jnp.float32)
    else:
        # dim full-slab FMAs: acc = sum_c U[:, c] (lane-bcast) * psi[c, :] (sublane-bcast)
        acc = u[:, 0:1] * psi[0:1, :]
        for c in range(1, dim):  # dim <= 8: unrolled at trace time
            acc = acc + u[:, c:c + 1] * psi[c:c + 1, :]
    if normalize:
        # One whole ket per grid step on this path -> plain full-tile reduce.
        acc = acc * jax.lax.rsqrt(jnp.sum(acc * acc))
    out_ref[...] = acc.astype(out_ref.dtype)


def _apply_gate_cols(u_mat, psi_cols):
    """No-normalization path. psi_cols: (dim, B*R) lane-dense column slab."""
    dim, total = psi_cols.shape
    ct = _pick_col_tile(total)
    kernel = functools.partial(_gate_kernel, dim=dim, normalize=False,
                               use_mxu=dim > _VPU_MAX_DIM)
    block_bytes = dim * ct * psi_cols.dtype.itemsize
    return pl.pallas_call(
        kernel,
        out_shape=jax.ShapeDtypeStruct((dim, total), psi_cols.dtype),
        grid=(total // ct,),
        in_specs=[pl.BlockSpec((dim, dim), lambda i: (0, 0)),   # U resident
                  pl.BlockSpec((dim, ct), lambda i: (0, i))],
        out_specs=pl.BlockSpec((dim, ct), lambda i: (0, i)),
        compiler_params=_compiler_params(block_bytes),
    )(u_mat, psi_cols)


def _apply_gate_kets(u_mat, psi_kets):
    """Normalization path. psi_kets: (B, dim, R); one whole ket per grid step."""
    B, dim, R = psi_kets.shape
    kernel = functools.partial(_gate_kernel, dim=dim, normalize=True,
                               use_mxu=dim > _VPU_MAX_DIM)
    block_bytes = dim * R * psi_kets.dtype.itemsize
    return pl.pallas_call(
        kernel,
        out_shape=jax.ShapeDtypeStruct((B, dim, R), psi_kets.dtype),
        grid=(B,),
        in_specs=[pl.BlockSpec((dim, dim), lambda b: (0, 0)),   # U resident
                  pl.BlockSpec((None, dim, R), lambda b: (b, 0, 0))],
        out_specs=pl.BlockSpec((None, dim, R), lambda b: (b, 0, 0)),
        compiler_params=_compiler_params(block_bytes),
    )(u_mat, psi_kets)


def gate_layer_forward(U, kob, lanes, dagger=False, normalize_afterwards=False):
    """Mirrors GateLayer.forward.

    U:     operator of shape (2,)*(2k)
    kob:   batch of kets, shape (B,) + (2,)*n
    lanes: list of k qubit indices the gate acts on.
    """
    k = len(lanes)
    n = kob.ndim - 1
    dim = 2 ** k
    R = 2 ** (n - k)
    B = kob.shape[0]

    U = jnp.asarray(U)
    if (jnp.issubdtype(kob.dtype, jnp.complexfloating)
            or jnp.issubdtype(U.dtype, jnp.complexfloating)):
        # TODO(synk): complex amplitudes (and conjugation under dagger) are not
        #             implemented; fail loudly rather than dropping imag parts.
        raise NotImplementedError("complex amplitudes are not supported")

    u_mat = U.astype(jnp.float32).reshape(dim, dim)
    if dagger:
        u_mat = u_mat.T  # module spec: Ut = U.reshape(dim, dim).T.reshape(shape)

    lane_axes = [l + 1 for l in lanes]

    if normalize_afterwards:
        # (B, dim, R): one whole ket per grid step so the norm fuses in-kernel.
        dst = list(range(1, k + 1))
        psi = jnp.moveaxis(kob, lane_axes, dst)
        gathered_shape = psi.shape
        out_kets = _apply_gate_kets(u_mat, psi.reshape(B, dim, R))
        out = out_kets.reshape(gathered_shape)
        return jnp.moveaxis(out, dst, lane_axes)

    # (dim, B*R) b-major lane-dense columns; state DMA'd in its own dtype.
    src = lane_axes + [0]
    dst = list(range(k)) + [k]
    psi = jnp.moveaxis(kob, src, dst)
    gathered_shape = psi.shape
    out_cols = _apply_gate_cols(u_mat, psi.reshape(dim, B * R))
    out = out_cols.reshape(gathered_shape)
    return jnp.moveaxis(out, dst, src)


def _reference_forward(U, kob, lanes, dagger=False, normalize_afterwards=False):
    k = len(lanes)
    dim = 2 ** k
    u_mat = jnp.asarray(U, jnp.float32).reshape(dim, dim)
    if dagger:
        u_mat = u_mat.T
    src = [l + 1 for l in lanes]
    dst = list(range(1, k + 1))
    psi = jnp.moveaxis(kob, src, dst)
    B = kob.shape[0]
    psi_flat = psi.reshape(B, dim, -1)
    y = jnp.einsum("ac,bcr->bar", u_mat, psi_flat)
    if normalize_afterwards:
        y = y / jnp.sqrt(jnp.sum(y * y, axis=(1, 2), keepdims=True))
    y = y.reshape(psi.shape)
    return jnp.moveaxis(y, dst, src)


if __name__ == "__main__":
    key = jax.random.PRNGKey(0)
    k_u, k_psi = jax.random.split(key)

    n_qubits = 8          # 8-qubit state -> 2**8 = 256 amplitudes
    batch = 4
    lanes = [2, 5]        # 2-qubit gate
    k = len(lanes)
    dim = 2 ** k

    # Deterministic synthetic gate: real orthogonal 4x4 (QR of a random matrix),
    # stored in operator shape (2,2,2,2) as the torch module would hold U.
    g = jax.random.normal(k_u, (dim, dim), dtype=jnp.float32)
    q, _ = jnp.linalg.qr(g)
    U = q.reshape((2,) * (2 * k)).astype(jnp.float32)

    # Deterministic batch of kets, unit-normalized, shape (B,) + (2,)*n.
    amps = jax.random.normal(k_psi, (batch, 2 ** n_qubits), dtype=jnp.float32)
    amps = amps / jnp.linalg.norm(amps, axis=1, keepdims=True)
    kob = amps.reshape((batch,) + (2,) * n_qubits)

    # Forward pass (U path, no normalization: lane-dense column-tiled grid).
    out = jax.block_until_ready(gate_layer_forward(U, kob, lanes))
    ref = _reference_forward(U, kob, lanes)
    np.testing.assert_allclose(np.asarray(out), np.asarray(ref),
                               rtol=1e-5, atol=1e-5)

    # Dagger (Ut) path with per-ket normalization (per-ket grid, fused norm).
    out_d = jax.block_until_ready(
        gate_layer_forward(U, kob, lanes, dagger=True, normalize_afterwards=True))
    ref_d = _reference_forward(U, kob, lanes, dagger=True,
                               normalize_afterwards=True)
    np.testing.assert_allclose(np.asarray(out_d), np.asarray(ref_d),
                               rtol=1e-5, atol=1e-5)

    # Unordered lanes (gate axis order differs from qubit order).
    lanes2 = [6, 1]
    out2 = jax.block_until_ready(gate_layer_forward(U, kob, lanes2))
    ref2 = _reference_forward(U, kob, lanes2)
    np.testing.assert_allclose(np.asarray(out2), np.asarray(ref2),
                               rtol=1e-5, atol=1e-5)

    print("KERNEL_OK")
</pallas_src>

<mosaic_0001>
module attributes {stable_mosaic.version = 11 : i64} {
  func.func @_gate_kernel(%arg0: i32, %arg1: memref<4x4xf32, #tpu.memory_space<vmem>>, %arg2: memref<4x256xf32, #tpu.memory_space<vmem>>, %arg3: memref<4x256xf32, #tpu.memory_space<vmem>>) attributes {dimension_semantics = [#tpu.dimension_semantics<parallel>], iteration_bounds = array<i64: 1>, scalar_prefetch = 0 : i64, scratch_operands = 0 : i64, tpu.core_type = #tpu.core_type<tc>, window_params = [{pipeline_mode = #tpu.pipeline_mode<synchronous>, transform_indices = @transform_0, window_bounds = array<i64: 4, 4>}, {transform_indices = @transform_1, window_bounds = array<i64: 4, 256>}, {transform_indices = @transform_2, window_bounds = array<i64: 4, 256>}]} {
    %c0 = arith.constant 0 : index
    %c0_0 = arith.constant 0 : index
    %0 = vector.load %arg2[%c0, %c0_0] : memref<4x256xf32, #tpu.memory_space<vmem>>, vector<4x256xf32>
    %c0_1 = arith.constant 0 : index
    %c0_2 = arith.constant 0 : index
    %1 = vector.load %arg1[%c0_1, %c0_2] : memref<4x4xf32, #tpu.memory_space<vmem>>, vector<4x4xf32>
    %2 = vector.extract_strided_slice %1 {offsets = [0, 0], sizes = [4, 1], strides = [1, 1]} : vector<4x4xf32> to vector<4x1xf32>
    %3 = vector.extract_strided_slice %0 {offsets = [0, 0], sizes = [1, 256], strides = [1, 1]} : vector<4x256xf32> to vector<1x256xf32>
    %4 = vector.broadcast %2 : vector<4x1xf32> to vector<4x256xf32>
    %5 = vector.broadcast %3 : vector<1x256xf32> to vector<4x256xf32>
    %6 = arith.mulf %4, %5 : vector<4x256xf32>
    %7 = vector.extract_strided_slice %1 {offsets = [0, 1], sizes = [4, 1], strides = [1, 1]} : vector<4x4xf32> to vector<4x1xf32>
    %8 = vector.extract_strided_slice %0 {offsets = [1, 0], sizes = [1, 256], strides = [1, 1]} : vector<4x256xf32> to vector<1x256xf32>
    %9 = vector.broadcast %7 : vector<4x1xf32> to vector<4x256xf32>
    %10 = vector.broadcast %8 : vector<1x256xf32> to vector<4x256xf32>
    %11 = arith.mulf %9, %10 : vector<4x256xf32>
    %12 = arith.addf %6, %11 : vector<4x256xf32>
    %13 = vector.extract_strided_slice %1 {offsets = [0, 2], sizes = [4, 1], strides = [1, 1]} : vector<4x4xf32> to vector<4x1xf32>
    %14 = vector.extract_strided_slice %0 {offsets = [2, 0], sizes = [1, 256], strides = [1, 1]} : vector<4x256xf32> to vector<1x256xf32>
    %15 = vector.broadcast %13 : vector<4x1xf32> to vector<4x256xf32>
    %16 = vector.broadcast %14 : vector<1x256xf32> to vector<4x256xf32>
    %17 = arith.mulf %15, %16 : vector<4x256xf32>
    %18 = arith.addf %12, %17 : vector<4x256xf32>
    %19 = vector.extract_strided_slice %1 {offsets = [0, 3], sizes = [4, 1], strides = [1, 1]} : vector<4x4xf32> to vector<4x1xf32>
    %20 = vector.extract_strided_slice %0 {offsets = [3, 0], sizes = [1, 256], strides = [1, 1]} : vector<4x256xf32> to vector<1x256xf32>
    %21 = vector.broadcast %19 : vector<4x1xf32> to vector<4x256xf32>
    %22 = vector.broadcast %20 : vector<1x256xf32> to vector<4x256xf32>
    %23 = arith.mulf %21, %22 : vector<4x256xf32>
    %24 = arith.addf %18, %23 : vector<4x256xf32>
    %c0_3 = arith.constant 0 : index
    %c0_4 = arith.constant 0 : index
    %25 = vector.load %arg3[%c0_3, %c0_4] : memref<4x256xf32, #tpu.memory_space<vmem>>, vector<4x256xf32>
    tpu.vector_store %arg3[%c0_3, %c0_4], %24 {strides = array<i32>} : memref<4x256xf32, #tpu.memory_space<vmem>>, vector<4x256xf32>,
    return
  }
  func.func @transform_0(%arg0: i32) -> (i32, i32) {
    %c0_i32 = arith.constant 0 : i32
    %c0_i32_0 = arith.constant 0 : i32
    %c0_i32_1 = arith.constant 0 : i32
    return %c0_i32, %c0_i32_0 : i32, i32
  }
  func.func @transform_1(%arg0: i32) -> (i32, i32) {
    %c0_i32 = arith.constant 0 : i32
    %c0_i32_0 = arith.constant 0 : i32
    return %c0_i32, %arg0 : i32, i32
  }
  func.func @transform_2(%arg0: i32) -> (i32, i32) {
    %c0_i32 = arith.constant 0 : i32
    %c0_i32_0 = arith.constant 0 : i32
    return %c0_i32, %arg0 : i32, i32
  }
}

</mosaic_0001>

<llo_original>
// kernel: tpu_custom_call.1
$region0: #{tpu_custom_call.1}
  #allocation0 [shape = 'u32[]', space=smem, size = 0x4, offset = 0x4, fixed_abs, tag = 'smem constant byte address 0x4 - core index']
  #allocation1 [shape = 'u32[144,128]{1,0:T(1,128)}', space=vmem, size = 0x12000, scoped, tag = 'internal scratch']
  %s0 = inlined_call_operand.hbm [shape: f32[4,4], index: 0, kind: input, shape index: {}]
  %s1 = inlined_call_operand.hbm [shape: f32[4,256], index: 1, kind: input, shape index: {}]
  %s2 = inlined_call_operand.hbm [shape: f32[4,256], index: 2, kind: output, shape index: {}]
  %s3 = sld [smem:[#allocation0]]
  $region26: #{tpu_custom_call.1} parent=0
    _
  %s5 = ssub.s32 1, %s3
  %s6 = scalar_select 0, %s5, %s3
  $region1: #{tpu_custom_call.1} parent=0
    #allocation2 [shape = 'u8[2048]{0}', space=vmem, size = 0x800, scoped, tag = 'input window, operand 0, single buffered']
    #allocation3 [shape = 's32[1]{0}', space=sflag, size = 0x4, scoped, tag = 'scoped memory for tpu_custom_call.1']
    #allocation4 [shape = 's32[1]{0}', space=sflag, size = 0x4, scoped, tag = 'scoped memory for tpu_custom_call.1']
    #allocation5 [shape = 'u8[4096]{0}', space=vmem, size = 0x1000, scoped, tag = 'input window, operand 1, single buffered']
    #allocation6 [shape = 's32[1]{0}', space=sflag, size = 0x4, scoped, tag = 'scoped memory for tpu_custom_call.1']
    #allocation7 [shape = 'u8[4096]{0}', space=vmem, size = 0x1000, scoped, tag = 'output window, operand 0, single buffered']
    %7 = vsyncpa [#allocation3], 0
    %8 = vsyncpa [#allocation6], 0
    %9 = vsyncpa [#allocation4], 0
    // Predicated region
    $region2: #{tpu_custom_call.1} parent=1 // pred_check
      _
    $region3: #{tpu_custom_call.1} parent=1 // pred_check_branch
      %11 = sbr.rel (0) target = $region5
    $region4: #{tpu_custom_call.1} parent=1 // pred_region
      %s13 = ssub.s32 64, 64
      %14 = vsyncadd [#allocation3], %s13
      %s16 = sshll.u32 [#allocation2], 4
      %s17 = int_to_ptr.vmem [resolvable:$true] %s16
      %19 = dma.hbm_to_vmem [thread:$0]  %s0, 64, %s17, [#allocation3]
    $region5: #{tpu_custom_call.1} parent=1 // pred_fallthru
      _
    // Predicated region
    $region6: #{tpu_custom_call.1} parent=1 // pred_check
      _
    $region7: #{tpu_custom_call.1} parent=1 // pred_check_branch
      %21 = sbr.rel (0) target = $region9
    $region8: #{tpu_custom_call.1} parent=1 // pred_region
      %s23 = ssub.s32 128, 128
      %24 = vsyncadd [#allocation6], %s23
      %s26 = sshll.u32 [#allocation5], 4
      %s27 = int_to_ptr.vmem [resolvable:$true] %s26
      %29 = dma.hbm_to_vmem [thread:$0]  %s1, 128, %s27, [#allocation6]
    $region9: #{tpu_custom_call.1} parent=1 // pred_fallthru
      _
    // Predicated region
    $region10: #{tpu_custom_call.1} parent=1 // pred_check
      _
    $region11: #{tpu_custom_call.1} parent=1 // pred_check_branch
      %31 = sbr.rel (0) target = $region13
    $region12: #{tpu_custom_call.1} parent=1 // pred_region
      %32 = dma.done [#allocation3], 64
    $region13: #{tpu_custom_call.1} parent=1 // pred_fallthru
      _
    // Predicated region
    $region14: #{tpu_custom_call.1} parent=1 // pred_check
      _
    $region15: #{tpu_custom_call.1} parent=1 // pred_check_branch
      %34 = sbr.rel (0) target = $region17
    $region16: #{tpu_custom_call.1} parent=1 // pred_region
      %35 = dma.done [#allocation6], 128
    $region17: #{tpu_custom_call.1} parent=1 // pred_fallthru
      _
    %v36 = vld [vmem:[#allocation5] sm:$0xff]
    %v37 = vld [vmem:[#allocation2] sm:$0xf]
    %39 = vset.pattern.permute.xlu0 0
    %40 = vperm.xlu0 %39, %v37
    %v41 = vpop.permute.xlu0 %40
    %v44 = vlaneseq
    %v45 = vshrl.u32 %v44, 7
    %v46 = vsub.s32 0, %v45
    %v47 = vrot.slane %v36, %v46
    %v48 = vlaneseq
    %v49 = vshrl.u32 %v48, 7
    %v50 = vsub.s32 4, %v49
    %v51 = vrot.slane %v36, %v50
    %v54 = vlaneseq
    %v55 = vshrl.u32 %v54, 7
    %v56 = vsub.s32 0, %v55
    %v57 = vrot.slane %v47, %v56
    %v58 = vlaneseq
    %v59 = vshrl.u32 %v58, 7
    %v60 = vsub.s32 0, %v59
    %v61 = vrot.slane %v51, %v60
    %v62 = vmul.f32 %v41, %v57
    %v63 = vmul.f32 %v41, %v61
    %64 = vset.pattern.permute.xlu0 1
    %65 = vperm.xlu0 %64, %v37
    %v66 = vpop.permute.xlu0 %65
    %v68 = vlaneseq
    %v69 = vshrl.u32 %v68, 7
    %v70 = vsub.s32 1, %v69
    %v71 = vrot.slane %v36, %v70
    %v72 = vlaneseq
    %v73 = vshrl.u32 %v72, 7
    %v74 = vsub.s32 5, %v73
    %v75 = vrot.slane %v36, %v74
    %v78 = vlaneseq
    %v79 = vshrl.u32 %v78, 7
    %v80 = vsub.s32 1, %v79
    %v81 = vrot.slane %v71, %v80
    %v82 = vlaneseq
    %v83 = vshrl.u32 %v82, 7
    %v84 = vsub.s32 1, %v83
    %v85 = vrot.slane %v75, %v84
    %v86 = vmul.f32 %v66, %v81
    %v87 = vmul.f32 %v66, %v85
    %v88 = vadd.f32 %v62, %v86
    %v89 = vadd.f32 %v63, %v87
    %90 = vset.pattern.permute.xlu0 2
    %91 = vperm.xlu0 %90, %v37
    %v92 = vpop.permute.xlu0 %91
    %v94 = vlaneseq
    %v95 = vshrl.u32 %v94, 7
    %v96 = vsub.s32 2, %v95
    %v97 = vrot.slane %v36, %v96
    %v98 = vlaneseq
    %v99 = vshrl.u32 %v98, 7
    %v100 = vsub.s32 6, %v99
    %v101 = vrot.slane %v36, %v100
    %v104 = vlaneseq
    %v105 = vshrl.u32 %v104, 7
    %v106 = vsub.s32 2, %v105
    %v107 = vrot.slane %v97, %v106
    %v108 = vlaneseq
    %v109 = vshrl.u32 %v108, 7
    %v110 = vsub.s32 2, %v109
    %v111 = vrot.slane %v101, %v110
    %v112 = vmul.f32 %v92, %v107
    %v113 = vmul.f32 %v92, %v111
    %v114 = vadd.f32 %v88, %v112
    %v115 = vadd.f32 %v89, %v113
    %116 = vset.pattern.permute.xlu0 3
    %117 = vperm.xlu0 %116, %v37
    %v118 = vpop.permute.xlu0 %117
    %v120 = vlaneseq
    %v121 = vshrl.u32 %v120, 7
    %v122 = vsub.s32 3, %v121
    %v123 = vrot.slane %v36, %v122
    %v124 = vlaneseq
    %v125 = vshrl.u32 %v124, 7
    %v126 = vsub.s32 7, %v125
    %v127 = vrot.slane %v36, %v126
    %v130 = vlaneseq
    %v131 = vshrl.u32 %v130, 7
    %v132 = vsub.s32 3, %v131
    %v133 = vrot.slane %v123, %v132
    %v134 = vlaneseq
    %v135 = vshrl.u32 %v134, 7
    %v136 = vsub.s32 3, %v135
    %v137 = vrot.slane %v127, %v136
    %v138 = vmul.f32 %v118, %v133
    %v139 = vmul.f32 %v118, %v137
    %v140 = vadd.f32 %v114, %v138
    %v141 = vadd.f32 %v115, %v139
    %v144 = vcombine.low %v140, %v141
    %146 = vst [vmem:[#allocation7] sm:$0xff] %v144
    // Predicated region
    $region18: #{tpu_custom_call.1} parent=1 // pred_check
      _
    $region19: #{tpu_custom_call.1} parent=1 // pred_check_branch
      %148 = sbr.rel (0) target = $region21
    $region20: #{tpu_custom_call.1} parent=1 // pred_region
      %s150 = ssub.s32 128, 128
      %151 = vsyncadd [#allocation4], %s150
      %s153 = sshll.u32 [#allocation7], 4
      %s154 = int_to_ptr.vmem [resolvable:$true] %s153
      %156 = dma.vmem_to_hbm [thread:$0]  %s154, 128, %s2, [#allocation4]
    $region21: #{tpu_custom_call.1} parent=1 // pred_fallthru
      _
    // Predicated region
    $region22: #{tpu_custom_call.1} parent=1 // pred_check
      _
    $region23: #{tpu_custom_call.1} parent=1 // pred_check_branch
      %158 = sbr.rel (0) target = $region25
    $region24: #{tpu_custom_call.1} parent=1 // pred_region
      %159 = dma.done [#allocation4], 128
    $region25: #{tpu_custom_call.1} parent=1 // pred_fallthru
      _
    %160 = vsyncpa [#allocation3], 1
    %161 = vsyncpa [#allocation6], 1
    %162 = vsyncpa [#allocation4], 1

</llo_original>
